<compile_context>
chip_gen: v7x
topology: tpu7x:2x2x1
jax: 0.10.0
libtpu: 0.0.40
codegen_flags: <defaults>
</compile_context>

<pallas_src>
import functools
import numpy as np

import jax
import jax.numpy as jnp
from jax import lax
from jax.experimental import pallas as pl
from jax.experimental.pallas import tpu as pltpu


# ----------------------------------------------------------------------------
# Geometry helpers (same semantics as HPNet utils) -- plain JAX glue.
# ----------------------------------------------------------------------------
def wrap_angle(angle):
    return (angle + jnp.pi) % (2.0 * jnp.pi) - jnp.pi


def transform_point_to_local_coordinate(point, position, heading):
    vec = point - position
    c, s = jnp.cos(heading), jnp.sin(heading)
    x = c * vec[..., 0] + s * vec[..., 1]
    y = -s * vec[..., 0] + c * vec[..., 1]
    return jnp.stack([x, y], axis=-1)


def compute_angles_lengths_2D(vector):
    length = jnp.sqrt(vector[..., 0] ** 2 + vector[..., 1] ** 2)
    theta = jnp.arctan2(vector[..., 1], vector[..., 0])
    return length, theta


def generate_reachable_matrix_np(edge_index, num_hops, num_nodes):
    """hop-i edge lists: nonzero pattern of A^i (numpy, static shapes)."""
    adj = np.zeros((num_nodes, num_nodes), dtype=np.int64)
    adj[edge_index[0], edge_index[1]] = 1
    cur = adj.copy()
    out = []
    for _ in range(num_hops):
        src, dst = np.nonzero(cur)
        out.append(np.stack([src, dst], axis=0).astype(np.int64))
        cur = ((cur @ adj) > 0).astype(np.int64)
    return out


def _pad_rows(x, n):
    return jnp.zeros((n,) + x.shape[1:], x.dtype).at[: x.shape[0]].set(x)


def _ceil_to(n, m):
    return ((n + m - 1) // m) * m


# ----------------------------------------------------------------------------
# Pallas kernel 1: TwoLayerMLP  (Linear -> LayerNorm -> ReLU -> Linear)
#   - row tiles up to 1024 (single block for small inputs)
#   - b1 / ln_w / ln_b / b2 folded into one (4, hidden) operand
#   - din==1 first layer runs on the VPU (broadcast multiply, no MXU round trip)
#   - hidden->out matmul uses bf16 MXU operands, f32 accumulation
# ----------------------------------------------------------------------------
def _two_layer_mlp_kernel(x_ref, w1_ref, w2_ref, sp_ref, o_ref, *, din_is_one):
    x = x_ref[...].astype(jnp.float32)
    b1 = sp_ref[0:1, :]
    ln_w = sp_ref[1:2, :]
    ln_b = sp_ref[2:3, :]
    b2 = sp_ref[3:4, :]
    if din_is_one:
        # K=1 "matmul" is a broadcast outer product -> do it on the VPU.
        h = x * w1_ref[0:1, :] + b1
    else:
        # K<=8: keep f32, no MXU win from bf16 at this contraction size.
        h = jnp.dot(x, w1_ref[...], preferred_element_type=jnp.float32) + b1
    mu = jnp.mean(h, axis=-1, keepdims=True)
    var = jnp.mean((h - mu) ** 2, axis=-1, keepdims=True)
    h = (h - mu) * lax.rsqrt(var + 1e-5) * ln_w + ln_b
    h = jnp.maximum(h, 0.0)
    o_ref[...] = (jnp.dot(h.astype(jnp.bfloat16), w2_ref[...],
                          preferred_element_type=jnp.float32) + b2)


def two_layer_mlp(x, params, max_tile=1024):
    n, din = x.shape
    hidden = params["w2"].shape[1]
    if n <= max_tile:
        tile = _ceil_to(max(n, 8), 8)     # single block, no grid overhead
    else:
        tile = max_tile
    n_pad = _ceil_to(max(n, 1), tile)
    x_pad = _pad_rows(x.astype(jnp.float32), n_pad)

    sp = jnp.concatenate(
        [params["b1"], params["ln_w"], params["ln_b"], params["b2"]], axis=0)
    w1 = params["w1"]
    w2 = params["w2"].astype(jnp.bfloat16)

    kernel = functools.partial(_two_layer_mlp_kernel, din_is_one=(din == 1))
    out = pl.pallas_call(
        kernel,
        out_shape=jax.ShapeDtypeStruct((n_pad, hidden), jnp.float32),
        grid=(n_pad // tile,),
        in_specs=[
            pl.BlockSpec((tile, din), lambda i: (i, 0)),
            pl.BlockSpec(w1.shape, lambda i: (0, 0)),
            pl.BlockSpec(w2.shape, lambda i: (0, 0)),
            pl.BlockSpec(sp.shape, lambda i: (0, 0)),
        ],
        out_specs=pl.BlockSpec((tile, hidden), lambda i: (i, 0)),
        compiler_params=pltpu.CompilerParams(
            dimension_semantics=("parallel",)),
    )(x_pad, w1, w2, sp)
    return out[:n]


# ----------------------------------------------------------------------------
# Pallas kernel 2: GraphAttention (flash-style segment softmax over edges
# sorted by destination, with a data-dependent edge-tile window per dest tile).
#   grid = (dest tiles ["parallel"], edge-tile offset j ["arbitrary"])
#   scalar-prefetched per-dest-tile (start_edge_tile, count): edge-stream
#   index_maps return start[i]+j; work guarded by pl.when(j < count[i]).
#   Online softmax accumulators (m/l/acc) in VMEM scratch; residual + pre-norm
#   FFN fused into the finalize step.  Parameters folded into 2 stacked operands.
# ----------------------------------------------------------------------------
LN_BIAS_ORDER = ["ln_dst_w", "ln_dst_b", "ln_src_w", "ln_src_b",
                 "ln_edge_w", "ln_edge_b", "bq", "bk", "bv", "bke", "bve",
                 "bo", "ln_ff_w", "ln_ff_b", "bf2"]
W_STACK_ORDER = ["wq", "wk", "wv", "wke", "wve", "wo"]
_LB_IDX = {k: i for i, k in enumerate(LN_BIAS_ORDER)}
_W_IDX = {k: i for i, k in enumerate(W_STACK_ORDER)}


def _graph_attention_kernel(start_ref, count_ref,
                            x_dst_ref, x_src_ref, e_attr_ref, dst_id_ref,
                            lnb_ref, wstack_ref, wf1_ref, bf1_ref, wf2_ref,
                            o_ref,
                            q_sc, m_sc, l_sc, acc_sc,
                            *, num_heads):
    i = pl.program_id(0)
    j = pl.program_id(1)
    n_j = pl.num_programs(1)
    tile_d, hidden = o_ref.shape
    head_dim = hidden // num_heads
    scale = 1.0 / float(np.sqrt(head_dim))

    def lb(name):
        k = _LB_IDX[name]
        return lnb_ref[k:k + 1, :]

    def wmat(name):
        k = _W_IDX[name]
        return wstack_ref[k * hidden:(k + 1) * hidden, :]

    def ln(x, w, b):
        mu = jnp.mean(x, axis=-1, keepdims=True)
        var = jnp.mean((x - mu) ** 2, axis=-1, keepdims=True)
        return (x - mu) * lax.rsqrt(var + 1e-5) * w + b

    # ---- init: per-destination-tile query (pre-scaled) + flash accumulators ----
    @pl.when(j == 0)
    def _init():
        h_dst = ln(x_dst_ref[...].astype(jnp.float32), lb("ln_dst_w"), lb("ln_dst_b"))
        q = (jnp.dot(h_dst.astype(jnp.bfloat16), wmat("wq"),
                     preferred_element_type=jnp.float32) + lb("bq"))
        q_sc[...] = q * scale                 # fold 1/sqrt(head_dim) into q once
        m_sc[...] = jnp.zeros_like(m_sc)      # 0-init: masked scores underflow in exp
        l_sc[...] = jnp.zeros_like(l_sc)
        acc_sc[...] = jnp.zeros_like(acc_sc)

    # ---- accumulate only over edge tiles that overlap this dest tile ----
    @pl.when(j < count_ref[i])
    def _accumulate():
        tile_e = x_src_ref.shape[0]
        h_src = ln(x_src_ref[...].astype(jnp.float32), lb("ln_src_w"), lb("ln_src_b"))
        e_n = ln(e_attr_ref[...].astype(jnp.float32), lb("ln_edge_w"), lb("ln_edge_b"))
        h_src_b = h_src.astype(jnp.bfloat16)
        e_b = e_n.astype(jnp.bfloat16)
        k_e = (jnp.dot(h_src_b, wmat("wk"), preferred_element_type=jnp.float32)
               + lb("bk")
               + jnp.dot(e_b, wmat("wke"), preferred_element_type=jnp.float32)
               + lb("bke"))                                           # [E_t, H]
        v_e = (jnp.dot(h_src_b, wmat("wv"), preferred_element_type=jnp.float32)
               + lb("bv")
               + jnp.dot(e_b, wmat("wve"), preferred_element_type=jnp.float32)
               + lb("bve"))                                           # [E_t, H]

        # segment mask built in-kernel from int32 destination ids
        dst_ids = dst_id_ref[...]                                     # [1, E_t]
        rows = i * tile_d + lax.broadcasted_iota(jnp.int32, (tile_d, tile_e), 0)
        mask = dst_ids == rows                                        # [D_t, E_t]

        # per-head scores + online softmax; updates gathered and written once
        # full-width per tile (no per-head masked sub-lane stores).
        m_prev = m_sc[...]
        l_prev = l_sc[...]
        acc_prev = acc_sc[...]
        m_parts, l_parts, acc_parts = [], [], []
        for h in range(num_heads):
            sl = slice(h * head_dim, (h + 1) * head_dim)
            q_h = q_sc[:, sl].astype(jnp.bfloat16)                    # [D_t, hd]
            k_h = k_e[:, sl].astype(jnp.bfloat16)                     # [E_t, hd]
            s_h = lax.dot_general(q_h, k_h, (((1,), (1,)), ((), ())),
                                  preferred_element_type=jnp.float32)
            s_h = jnp.where(mask, s_h, -1e30)                         # [D_t, E_t]

            m_prev_h = m_prev[:, h:h + 1]
            m_new_h = jnp.maximum(m_prev_h, jnp.max(s_h, axis=-1, keepdims=True))
            alpha = jnp.exp(m_prev_h - m_new_h)
            p = jnp.exp(s_h - m_new_h)        # masked entries underflow to 0.0
            l_parts.append(alpha * l_prev[:, h:h + 1]
                           + jnp.sum(p, axis=-1, keepdims=True))
            acc_parts.append(
                alpha * acc_prev[:, sl]
                + jnp.dot(p.astype(jnp.bfloat16), v_e[:, sl].astype(jnp.bfloat16),
                          preferred_element_type=jnp.float32))
            m_parts.append(m_new_h)
        m_sc[...] = jnp.concatenate(m_parts, axis=-1)
        l_sc[...] = jnp.concatenate(l_parts, axis=-1)
        acc_sc[...] = jnp.concatenate(acc_parts, axis=-1)

    # ---- finalize: full-width normalize, output proj, residual, pre-norm FFN ----
    @pl.when(j == n_j - 1)
    def _finalize():
        inv = pl.reciprocal(jnp.maximum(l_sc[...], 1e-9), approx=True)  # [D_t, nh]
        inv_full = jnp.concatenate(
            [jnp.broadcast_to(inv[:, h:h + 1], (tile_d, head_dim))
             for h in range(num_heads)], axis=-1)                        # [D_t, H]
        agg = acc_sc[...] * inv_full             # no-edge rows stay zero
        out = jnp.dot(agg.astype(jnp.bfloat16), wmat("wo"),
                      preferred_element_type=jnp.float32) + lb("bo")
        x1 = x_dst_ref[...].astype(jnp.float32) + out          # residual
        h_ff = ln(x1, lb("ln_ff_w"), lb("ln_ff_b"))
        ff = jnp.maximum(
            jnp.dot(h_ff.astype(jnp.bfloat16), wf1_ref[...],
                    preferred_element_type=jnp.float32) + bf1_ref[...], 0.0)
        ff = jnp.dot(ff.astype(jnp.bfloat16), wf2_ref[...],
                     preferred_element_type=jnp.float32) + lb("bf2")
        o_ref[...] = x1 + ff


def graph_attention(x_dst, x_src, edge_attr, edge_index, params, num_heads,
                    tile_d_max=32, tile_e_max=256):
    d, hidden = x_dst.shape
    e = edge_index.shape[1]

    # --- sort edges by destination (graph structure is static numpy) ---
    src = np.asarray(edge_index[0])
    dst = np.asarray(edge_index[1])
    perm = np.argsort(dst, kind="stable")
    src_s = src[perm]
    dst_s = dst[perm]

    # --- tile sizes (single block for tiny graphs, lane/sublane aligned) ---
    tile_d = _ceil_to(max(d, 8), 8) if d <= tile_d_max else tile_d_max
    d_pad = _ceil_to(d, tile_d)
    tile_e = _ceil_to(max(e, 8), 8) if e <= tile_e_max else tile_e_max
    e_pad = _ceil_to(max(e, 1), tile_e)
    n_d_tiles = d_pad // tile_d
    n_e_tiles = e_pad // tile_e

    # --- per-edge gathered inputs (O(E*H) gathers, no O(E*S) one-hot) ---
    x_dst_p = _pad_rows(x_dst.astype(jnp.float32), d_pad)
    x_src_e = _pad_rows(x_src.astype(jnp.float32)[jnp.asarray(src_s)], e_pad)
    ea_p = _pad_rows(edge_attr.astype(jnp.float32)[jnp.asarray(perm)], e_pad)

    dst_id = np.full((1, e_pad), -1, np.int32)
    dst_id[0, :e] = dst_s.astype(np.int32)

    # --- data-dependent edge-tile window per destination tile (scalar prefetch) ---
    starts = np.zeros((n_d_tiles,), np.int32)
    counts = np.zeros((n_d_tiles,), np.int32)
    for t in range(n_d_tiles):
        lo, hi = t * tile_d, (t + 1) * tile_d
        sel = np.nonzero((dst_s >= lo) & (dst_s < hi))[0]
        if sel.size:
            t0 = int(sel[0] // tile_e)
            t1 = int(sel[-1] // tile_e)
            starts[t] = t0
            counts[t] = t1 - t0 + 1
    max_count = int(max(1, counts.max())) if n_d_tiles > 0 else 1

    # --- folded parameter operands ---
    lnb = jnp.concatenate([params[k] for k in LN_BIAS_ORDER], axis=0)          # (15,H)
    wstack = jnp.concatenate([params[k] for k in W_STACK_ORDER],
                             axis=0).astype(jnp.bfloat16)                      # (6H,H)
    wf1 = params["wf1"].astype(jnp.bfloat16)
    bf1 = params["bf1"]
    wf2 = params["wf2"].astype(jnp.bfloat16)

    def edge_block(i, j, start_ref, count_ref):
        return (jnp.minimum(start_ref[i] + j, n_e_tiles - 1), 0)

    def dstid_block(i, j, start_ref, count_ref):
        return (0, jnp.minimum(start_ref[i] + j, n_e_tiles - 1))

    kernel = functools.partial(_graph_attention_kernel, num_heads=num_heads)
    grid_spec = pltpu.PrefetchScalarGridSpec(
        num_scalar_prefetch=2,
        grid=(n_d_tiles, max_count),
        in_specs=[
            pl.BlockSpec((tile_d, hidden), lambda i, j, s, c: (i, 0)),   # x_dst
            pl.BlockSpec((tile_e, hidden), edge_block),                  # gathered src
            pl.BlockSpec((tile_e, hidden), edge_block),                  # edge attr
            pl.BlockSpec((1, tile_e), dstid_block),                      # dst ids
            pl.BlockSpec(lnb.shape, lambda i, j, s, c: (0, 0)),
            pl.BlockSpec(wstack.shape, lambda i, j, s, c: (0, 0)),
            pl.BlockSpec(wf1.shape, lambda i, j, s, c: (0, 0)),
            pl.BlockSpec(bf1.shape, lambda i, j, s, c: (0, 0)),
            pl.BlockSpec(wf2.shape, lambda i, j, s, c: (0, 0)),
        ],
        out_specs=pl.BlockSpec((tile_d, hidden), lambda i, j, s, c: (i, 0)),
        scratch_shapes=[
            pltpu.VMEM((tile_d, hidden), jnp.float32),       # q (pre-scaled)
            pltpu.VMEM((tile_d, num_heads), jnp.float32),    # m (per head)
            pltpu.VMEM((tile_d, num_heads), jnp.float32),    # l (per head)
            pltpu.VMEM((tile_d, hidden), jnp.float32),       # acc
        ],
    )
    out = pl.pallas_call(
        kernel,
        grid_spec=grid_spec,
        out_shape=jax.ShapeDtypeStruct((d_pad, hidden), jnp.float32),
        compiler_params=pltpu.CompilerParams(
            dimension_semantics=("parallel", "arbitrary"),
            vmem_limit_bytes=32 * 1024 * 1024),
    )(jnp.asarray(starts), jnp.asarray(counts),
      x_dst_p, x_src_e, ea_p, jnp.asarray(dst_id),
      lnb, wstack, wf1, bf1, wf2)
    return out[:d]


# ----------------------------------------------------------------------------
# Deterministic parameter initialization (synthetic weights).
# ----------------------------------------------------------------------------
def _dense(key, din, dout):
    w = (1.0 / np.sqrt(din)) * jax.random.normal(key, (din, dout), dtype=jnp.float32)
    b = jnp.zeros((1, dout), jnp.float32)
    return w, b


def init_two_layer_mlp(key, din, hidden, dout):
    k1, k2 = jax.random.split(key)
    w1, b1 = _dense(k1, din, hidden)
    w2, b2 = _dense(k2, hidden, dout)
    return dict(w1=w1, b1=b1,
                ln_w=jnp.ones((1, hidden), jnp.float32),
                ln_b=jnp.zeros((1, hidden), jnp.float32),
                w2=w2, b2=b2)


def init_graph_attention(key, hidden):
    ks = jax.random.split(key, 8)
    p = {}
    for name, k, din, dout in [("q", ks[0], hidden, hidden), ("k", ks[1], hidden, hidden),
                               ("v", ks[2], hidden, hidden), ("ke", ks[3], hidden, hidden),
                               ("ve", ks[4], hidden, hidden), ("o", ks[5], hidden, hidden),
                               ("f1", ks[6], hidden, 4 * hidden),
                               ("f2", ks[7], 4 * hidden, hidden)]:
        w, b = _dense(k, din, dout)
        p["w" + name] = w
        p["b" + name] = b
    ones = jnp.ones((1, hidden), jnp.float32)
    zeros = jnp.zeros((1, hidden), jnp.float32)
    for ln in ("ln_dst", "ln_src", "ln_edge", "ln_ff"):
        p[ln + "_w"] = ones
        p[ln + "_b"] = zeros
    return p


# ----------------------------------------------------------------------------
# MapEncoder forward (glue in JAX, hot paths in Pallas kernels above).
# ----------------------------------------------------------------------------
L2L_EDGE_TYPES = ["left_neighbor", "right_neighbor", "predecessor", "successor"]


def map_encoder_forward(data, params, num_heads, num_hops):
    # node embeddings
    p_embs = two_layer_mlp(data["p_length"][:, None], params["p_emb"])
    l_embs = two_layer_mlp(data["l_length"][:, None], params["l_emb"])

    # ---- polyline -> lane edge attributes ----
    p2l_ei = data["p2l_edge_index"]
    src, dst = np.asarray(p2l_ei[0]), np.asarray(p2l_ei[1])
    vec = transform_point_to_local_coordinate(
        data["p_position"][src], data["l_position"][dst], data["l_heading"][dst])
    length, theta = compute_angles_lengths_2D(vec)
    heading = wrap_angle(data["p_heading"][src] - data["l_heading"][dst])
    p2l_type = data["p_side"][src]
    p2l_attr_in = jnp.stack([length, theta, heading, p2l_type], axis=-1)     # [E1,4]
    p2l_attr_embs = two_layer_mlp(p2l_attr_in, params["p2l_emb"])

    # ---- lane -> lane edge attributes (edge list built statically) ----
    l2l_ei = data["l2l_edge_index"]
    s2, d2 = np.asarray(l2l_ei[0]), np.asarray(l2l_ei[1])
    vec2 = transform_point_to_local_coordinate(
        data["l_position"][s2], data["l_position"][d2], data["l_heading"][d2])
    len2, th2 = compute_angles_lengths_2D(vec2)
    hd2 = wrap_angle(data["l_heading"][s2] - data["l_heading"][d2])
    l2l_attr_in = jnp.concatenate(
        [len2[:, None], th2[:, None], hd2[:, None],
         data["l2l_hop"][:, None], data["l2l_type_onehot"]], axis=-1)        # [E2,8]
    l2l_attr_embs = two_layer_mlp(l2l_attr_in, params["l2l_emb"])

    # ---- attention layers (segment-softmax edge attention kernels) ----
    l_embs = graph_attention(l_embs, p_embs, p2l_attr_embs, p2l_ei,
                             params["p2l_attn"], num_heads)
    l_embs = graph_attention(l_embs, l_embs, l2l_attr_embs, l2l_ei,
                             params["l2l_attn"], num_heads)
    return l_embs


# ----------------------------------------------------------------------------
# Main: synthetic deterministic data + run.
# ----------------------------------------------------------------------------
if __name__ == "__main__":
    hidden_dim = 32
    num_heads = 4
    num_hops = 2
    dropout = 0.1  # inference: identity

    num_polylines, num_lanes = 12, 6

    key = jax.random.PRNGKey(0)
    keys = jax.random.split(key, 12)

    data = {
        "p_length": jax.random.uniform(keys[0], (num_polylines,), jnp.float32, 1.0, 10.0),
        "p_position": jax.random.uniform(keys[1], (num_polylines, 2), jnp.float32, -50.0, 50.0),
        "p_heading": jax.random.uniform(keys[2], (num_polylines,), jnp.float32, -np.pi, np.pi),
        "p_side": jnp.asarray(np.arange(num_polylines) % 3, jnp.float32),
        "l_length": jax.random.uniform(keys[3], (num_lanes,), jnp.float32, 1.0, 30.0),
        "l_position": jax.random.uniform(keys[4], (num_lanes, 2), jnp.float32, -50.0, 50.0),
        "l_heading": jax.random.uniform(keys[5], (num_lanes,), jnp.float32, -np.pi, np.pi),
    }

    # polyline -> lane edges (each polyline attached to one lane)
    p2l_edge_index = np.stack(
        [np.arange(num_polylines), np.arange(num_polylines) % num_lanes], axis=0)
    data["p2l_edge_index"] = p2l_edge_index

    # lane -> lane edges: left/right neighbor chains + multi-hop pred/succ
    left_ei = np.stack([np.arange(num_lanes - 1), np.arange(1, num_lanes)], axis=0)
    right_ei = np.stack([np.arange(1, num_lanes), np.arange(num_lanes - 1)], axis=0)
    pred_ei = np.stack([np.arange(1, num_lanes), np.arange(num_lanes - 1)], axis=0)
    succ_ei = np.stack([np.arange(num_lanes - 1), np.arange(1, num_lanes)], axis=0)

    l2l_edge_index, l2l_type, l2l_hop = [], [], []

    def _add(ei, type_name, hop):
        n = ei.shape[1]
        l2l_edge_index.append(ei)
        oh = np.zeros((n, len(L2L_EDGE_TYPES)), np.float32)
        oh[:, L2L_EDGE_TYPES.index(type_name)] = 1.0
        l2l_type.append(oh)
        l2l_hop.append(np.full((n,), float(hop), np.float32))

    _add(left_ei, "left_neighbor", 1)
    _add(right_ei, "right_neighbor", 1)
    for i, ei in enumerate(generate_reachable_matrix_np(pred_ei, num_hops, num_lanes)):
        _add(ei, "predecessor", i + 1)
    for i, ei in enumerate(generate_reachable_matrix_np(succ_ei, num_hops, num_lanes)):
        _add(ei, "successor", i + 1)

    data["l2l_edge_index"] = np.concatenate(l2l_edge_index, axis=1)
    data["l2l_type_onehot"] = jnp.asarray(np.concatenate(l2l_type, axis=0))
    data["l2l_hop"] = jnp.asarray(np.concatenate(l2l_hop, axis=0))

    pkeys = jax.random.split(jax.random.PRNGKey(1), 6)
    params = {
        "p_emb": init_two_layer_mlp(pkeys[0], 1, hidden_dim, hidden_dim),
        "l_emb": init_two_layer_mlp(pkeys[1], 1, hidden_dim, hidden_dim),
        "p2l_emb": init_two_layer_mlp(pkeys[2], 4, hidden_dim, hidden_dim),
        "l2l_emb": init_two_layer_mlp(pkeys[3], 8, hidden_dim, hidden_dim),
        "p2l_attn": init_graph_attention(pkeys[4], hidden_dim),
        "l2l_attn": init_graph_attention(pkeys[5], hidden_dim),
    }

    l_embs = map_encoder_forward(data, params, num_heads, num_hops)
    l_embs = jax.block_until_ready(l_embs)
    assert l_embs.shape == (num_lanes, hidden_dim)
    assert bool(jnp.all(jnp.isfinite(l_embs)))
    print("KERNEL_OK")
</pallas_src>

<mosaic_0001>
module attributes {stable_mosaic.version = 11 : i64} {
  func.func @_two_layer_mlp_kernel(%arg0: i32, %arg1: memref<16x1xf32, #tpu.memory_space<vmem>>, %arg2: memref<1x32xf32, #tpu.memory_space<vmem>>, %arg3: memref<32x32xbf16, #tpu.memory_space<vmem>>, %arg4: memref<4x32xf32, #tpu.memory_space<vmem>>, %arg5: memref<16x32xf32, #tpu.memory_space<vmem>>) attributes {dimension_semantics = [#tpu.dimension_semantics<parallel>], iteration_bounds = array<i64: 1>, scalar_prefetch = 0 : i64, scratch_operands = 0 : i64, tpu.core_type = #tpu.core_type<tc>, window_params = [{transform_indices = @transform_0, window_bounds = array<i64: 16, 1>}, {pipeline_mode = #tpu.pipeline_mode<synchronous>, transform_indices = @transform_1, window_bounds = array<i64: 1, 32>}, {pipeline_mode = #tpu.pipeline_mode<synchronous>, transform_indices = @transform_2, window_bounds = array<i64: 32, 32>}, {pipeline_mode = #tpu.pipeline_mode<synchronous>, transform_indices = @transform_3, window_bounds = array<i64: 4, 32>}, {transform_indices = @transform_4, window_bounds = array<i64: 16, 32>}]} {
    %c0 = arith.constant 0 : index
    %c0_0 = arith.constant 0 : index
    %0 = vector.load %arg1[%c0, %c0_0] : memref<16x1xf32, #tpu.memory_space<vmem>>, vector<16x1xf32>
    %c0_1 = arith.constant 0 : index
    %c0_2 = arith.constant 0 : index
    %1 = vector.load %arg4[%c0_1, %c0_2] : memref<4x32xf32, #tpu.memory_space<vmem>>, vector<1x32xf32>
    %c1 = arith.constant 1 : index
    %c0_3 = arith.constant 0 : index
    %2 = vector.load %arg4[%c1, %c0_3] : memref<4x32xf32, #tpu.memory_space<vmem>>, vector<1x32xf32>
    %c2 = arith.constant 2 : index
    %c0_4 = arith.constant 0 : index
    %3 = vector.load %arg4[%c2, %c0_4] : memref<4x32xf32, #tpu.memory_space<vmem>>, vector<1x32xf32>
    %c3 = arith.constant 3 : index
    %c0_5 = arith.constant 0 : index
    %4 = vector.load %arg4[%c3, %c0_5] : memref<4x32xf32, #tpu.memory_space<vmem>>, vector<1x32xf32>
    %c0_6 = arith.constant 0 : index
    %c0_7 = arith.constant 0 : index
    %5 = vector.load %arg2[%c0_6, %c0_7] : memref<1x32xf32, #tpu.memory_space<vmem>>, vector<1x32xf32>
    %6 = vector.broadcast %0 : vector<16x1xf32> to vector<16x32xf32>
    %7 = vector.broadcast %5 : vector<1x32xf32> to vector<16x32xf32>
    %8 = arith.mulf %6, %7 : vector<16x32xf32>
    %9 = vector.broadcast %1 : vector<1x32xf32> to vector<16x32xf32>
    %10 = arith.addf %8, %9 : vector<16x32xf32>
    %cst = arith.constant dense<0.000000e+00> : vector<16xf32>
    %11 = vector.multi_reduction <add>, %10, %cst [1] : vector<16x32xf32> to vector<16xf32>
    %12 = vector.shape_cast %11 : vector<16xf32> to vector<16x1xf32>
    %cst_8 = arith.constant 3.200000e+01 : f32
    %13 = vector.broadcast %cst_8 : f32 to vector<16x1xf32>
    %14 = arith.divf %12, %13 : vector<16x1xf32>
    %15 = vector.broadcast %14 : vector<16x1xf32> to vector<16x32xf32>
    %16 = arith.subf %10, %15 : vector<16x32xf32>
    %17 = arith.mulf %16, %16 : vector<16x32xf32>
    %cst_9 = arith.constant dense<0.000000e+00> : vector<16xf32>
    %18 = vector.multi_reduction <add>, %17, %cst_9 [1] : vector<16x32xf32> to vector<16xf32>
    %19 = vector.shape_cast %18 : vector<16xf32> to vector<16x1xf32>
    %cst_10 = arith.constant 3.200000e+01 : f32
    %20 = vector.broadcast %cst_10 : f32 to vector<16x1xf32>
    %21 = arith.divf %19, %20 : vector<16x1xf32>
    %22 = vector.broadcast %14 : vector<16x1xf32> to vector<16x32xf32>
    %23 = arith.subf %10, %22 : vector<16x32xf32>
    %cst_11 = arith.constant 9.99999974E-6 : f32
    %24 = vector.broadcast %cst_11 : f32 to vector<16x1xf32>
    %25 = arith.addf %21, %24 : vector<16x1xf32>
    %26 = math.rsqrt %25 : vector<16x1xf32>
    %27 = vector.broadcast %26 : vector<16x1xf32> to vector<16x32xf32>
    %28 = arith.mulf %23, %27 : vector<16x32xf32>
    %29 = vector.broadcast %2 : vector<1x32xf32> to vector<16x32xf32>
    %30 = arith.mulf %28, %29 : vector<16x32xf32>
    %31 = vector.broadcast %3 : vector<1x32xf32> to vector<16x32xf32>
    %32 = arith.addf %30, %31 : vector<16x32xf32>
    %cst_12 = arith.constant 0.000000e+00 : f32
    %33 = vector.broadcast %cst_12 : f32 to vector<16x32xf32>
    %34 = arith.maximumf %32, %33 : vector<16x32xf32>
    %35 = arith.truncf %34 : vector<16x32xf32> to vector<16x32xbf16>
    %c0_13 = arith.constant 0 : index
    %c0_14 = arith.constant 0 : index
    %36 = vector.load %arg3[%c0_13, %c0_14] : memref<32x32xbf16, #tpu.memory_space<vmem>>, vector<32x32xbf16>
    %cst_15 = arith.constant dense<0.000000e+00> : vector<16x32xf32>
    %37 = tpu.matmul %35, %36, %cst_15 {dimension_numbers = #tpu.dot_dimension_numbers<[1], [0], [0], [1], [0, 0, 1, 1], [], []>} : vector<16x32xbf16>, vector<32x32xbf16>, vector<16x32xf32> -> vector<16x32xf32>
    %38 = vector.broadcast %4 : vector<1x32xf32> to vector<16x32xf32>
    %39 = arith.addf %37, %38 : vector<16x32xf32>
    %c0_16 = arith.constant 0 : index
    %c0_17 = arith.constant 0 : index
    %40 = vector.load %arg5[%c0_16, %c0_17] : memref<16x32xf32, #tpu.memory_space<vmem>>, vector<16x32xf32>
    tpu.vector_store %arg5[%c0_16, %c0_17], %39 {strides = array<i32>} : memref<16x32xf32, #tpu.memory_space<vmem>>, vector<16x32xf32>,
    return
  }
  func.func @transform_0(%arg0: i32) -> (i32, i32) {
    %c0_i32 = arith.constant 0 : i32
    %c0_i32_0 = arith.constant 0 : i32
    return %arg0, %c0_i32 : i32, i32
  }
  func.func @transform_1(%arg0: i32) -> (i32, i32) {
    %c0_i32 = arith.constant 0 : i32
    %c0_i32_0 = arith.constant 0 : i32
    %c0_i32_1 = arith.constant 0 : i32
    return %c0_i32, %c0_i32_0 : i32, i32
  }
  func.func @transform_2(%arg0: i32) -> (i32, i32) {
    %c0_i32 = arith.constant 0 : i32
    %c0_i32_0 = arith.constant 0 : i32
    %c0_i32_1 = arith.constant 0 : i32
    return %c0_i32, %c0_i32_0 : i32, i32
  }
  func.func @transform_3(%arg0: i32) -> (i32, i32) {
    %c0_i32 = arith.constant 0 : i32
    %c0_i32_0 = arith.constant 0 : i32
    %c0_i32_1 = arith.constant 0 : i32
    return %c0_i32, %c0_i32_0 : i32, i32
  }
  func.func @transform_4(%arg0: i32) -> (i32, i32) {
    %c0_i32 = arith.constant 0 : i32
    %c0_i32_0 = arith.constant 0 : i32
    return %arg0, %c0_i32 : i32, i32
  }
}

</mosaic_0001>

<llo_original>
// kernel: tpu_custom_call.1
$region0: #{tpu_custom_call.1}
  #allocation0 [shape = 'u32[]', space=smem, size = 0x4, offset = 0x4, fixed_abs, tag = 'smem constant byte address 0x4 - core index']
  #allocation1 [shape = 'u32[144,128]{1,0:T(1,128)}', space=vmem, size = 0x12000, scoped, tag = 'internal scratch']
  %s0 = inlined_call_operand.vmem [shape: f32[16,1], index: 0, kind: input, shape index: {}]
  %s1 = inlined_call_operand.vmem [shape: f32[1,32], index: 1, kind: input, shape index: {}]
  %s2 = inlined_call_operand.vmem [shape: bf16[32,32], index: 2, kind: input, shape index: {}]
  %s3 = inlined_call_operand.vmem [shape: f32[4,32], index: 3, kind: input, shape index: {}]
  %s4 = inlined_call_operand.hbm [shape: f32[16,32], index: 4, kind: output, shape index: {}]
  %s5 = sld [smem:[#allocation0]]
  $region26: #{tpu_custom_call.1} parent=0
    _
  %s7 = ssub.s32 1, %s5
  %s8 = scalar_select 0, %s7, %s5
  $region1: #{tpu_custom_call.1} parent=0
    #allocation2 [shape = 'u8[8192]{0}', space=vmem, size = 0x2000, scoped, tag = 'output window, operand 0, single buffered']
    #allocation3 [shape = 's32[1]{0}', space=sflag, size = 0x4, scoped, tag = 'scoped memory for tpu_custom_call.1']
    %9 = vsyncpa [#allocation3], 0
    // Predicated region
    $region2: #{tpu_custom_call.1} parent=1 // pred_check
      _
    $region3: #{tpu_custom_call.1} parent=1 // pred_check_branch
      %11 = sbr.rel (0) target = $region5
    $region4: #{tpu_custom_call.1} parent=1 // pred_region
      _
    $region5: #{tpu_custom_call.1} parent=1 // pred_fallthru
      _
    // Predicated region
    $region6: #{tpu_custom_call.1} parent=1 // pred_check
      _
    $region7: #{tpu_custom_call.1} parent=1 // pred_check_branch
      %13 = sbr.rel (0) target = $region9
    $region8: #{tpu_custom_call.1} parent=1 // pred_region
      _
    $region9: #{tpu_custom_call.1} parent=1 // pred_fallthru
      _
    // Predicated region
    $region10: #{tpu_custom_call.1} parent=1 // pred_check
      _
    $region11: #{tpu_custom_call.1} parent=1 // pred_check_branch
      %15 = sbr.rel (0) target = $region13
    $region12: #{tpu_custom_call.1} parent=1 // pred_region
      _
    $region13: #{tpu_custom_call.1} parent=1 // pred_fallthru
      _
    // Predicated region
    $region14: #{tpu_custom_call.1} parent=1 // pred_check
      _
    $region15: #{tpu_custom_call.1} parent=1 // pred_check_branch
      %17 = sbr.rel (0) target = $region17
    $region16: #{tpu_custom_call.1} parent=1 // pred_region
      _
    $region17: #{tpu_custom_call.1} parent=1 // pred_fallthru
      _
    %v19 = vld [vmem:[%s0] sm:$0xff]
    %v20 = vld [vmem:[%s0 + $0x8] sm:$0xff]
    %v21 = vld [vmem:[%s3] sm:$0x1]
    %v22 = vld [vmem:[%s3 + $0x1] sm:$0x1]
    %v23 = vld [vmem:[%s3 + $0x2] sm:$0x1]
    %v24 = vld [vmem:[%s3 + $0x3] sm:$0x1]
    %v25 = vld [vmem:[%s1] sm:$0x1]
    %27 = vset.pattern.permute.xlu0 0
    %28 = vperm.xlu0 %27, %v19
    %v29 = vpop.permute.xlu0 %28
    %32 = vset.pattern.permute.xlu0 0
    %33 = vperm.xlu0 %32, %v20
    %v34 = vpop.permute.xlu0 %33
    %v37 = vlaneseq
    %v38 = vshrl.u32 %v37, 7
    %v39 = vsub.s32 0, %v38
    %v40 = vrot.slane %v25, %v39
    %v42 = vmul.f32 %v29, %v40
    %v43 = vmul.f32 %v34, %v40
    %v44 = vlaneseq
    %v45 = vshrl.u32 %v44, 7
    %v46 = vsub.s32 0, %v45
    %v47 = vrot.slane %v21, %v46
    %v48 = vadd.f32 %v42, %v47
    %v49 = vadd.f32 %v43, %v47
    %vm50 = vcmask 261120
    %v51 = vsel %vm50, %v48, 0.0
    %52 = vadd.xlane.f32.xlu0 %v51
    %v53 = vpop.xlane.xlu0 %52
    %v54 = vsel %vm50, %v49, 0.0
    %55 = vadd.xlane.f32.xlu0 %v54
    %v56 = vpop.xlane.xlu0 %55
    %v57 = vrcp.pop 32.0
    %v58 = vmul.f32 %v53, %v57
    %v59 = vmul.f32 %v56, %v57
    %v60 = vsub.f32 %v48, %v58
    %v61 = vsub.f32 %v49, %v59
    %v62 = vmul.f32 %v60, %v60
    %v63 = vmul.f32 %v61, %v61
    %v64 = vsel %vm50, %v62, 0.0
    %65 = vadd.xlane.f32.xlu0 %v64
    %v66 = vpop.xlane.xlu0 %65
    %v67 = vsel %vm50, %v63, 0.0
    %68 = vadd.xlane.f32.xlu0 %v67
    %v69 = vpop.xlane.xlu0 %68
    %v70 = vmul.f32 %v66, %v57
    %v71 = vmul.f32 %v69, %v57
    %v72 = vadd.f32 %v70, 1e-05
    %v73 = vadd.f32 %v71, 1e-05
    %v74 = vrsqrt.pop %v72
    %v75 = vrsqrt.pop %v73
    %v76 = vmul.f32 %v60, %v74
    %v77 = vmul.f32 %v61, %v75
    %v78 = vlaneseq
    %v79 = vshrl.u32 %v78, 7
    %v80 = vsub.s32 0, %v79
    %v81 = vrot.slane %v22, %v80
    %v82 = vmul.f32 %v76, %v81
    %v83 = vmul.f32 %v77, %v81
    %v84 = vlaneseq
    %v85 = vshrl.u32 %v84, 7
    %v86 = vsub.s32 0, %v85
    %v87 = vrot.slane %v23, %v86
    %v88 = vadd.f32 %v82, %v87
    %v89 = vadd.f32 %v83, %v87
    %v90 = vmax.f32 %v88, 0.0
    %v91 = vmax.f32 %v89, 0.0
    %v92 = vpack.c.bf16 %v91, %v90
    %v93 = vld [vmem:[%s2] sm:$0xf]
    %v94 = vld [vmem:[%s2 + $0x4] sm:$0xf]
    %v95 = vld [vmem:[%s2 + $0x8] sm:$0xf]
    %v96 = vld [vmem:[%s2 + $0xc] sm:$0xf]
    %v97 = vlaneseq
    %v98 = vshrl.u32 %v97, 7
    %v99 = vsub.s32 0, %v98
    %v100 = vrot.slane %v24, %v99
    %v105 = vunpack.c.l.b16 %v93
    %v106 = vunpack.c.l.b16 %v94
    %v107 = vunpack.c.l.b16 %v95
    %v108 = vunpack.c.l.b16 %v96
    %v109 = vpack.c.b16 %v106, %v105
    %v110 = vpack.c.b16 %v108, %v107
    %v114 = vsel %vm50, %v92, 0
    %116 = vmatprep.subr.bf16.mxu0 0
    %117 = vmatpush1.bf16.msra.mxu0 %v109
    %118 = vmatprep.subr.bf16.mxu0 0
    %119 = vmatpush1.bf16.msra.mxu0 %v110
    %120 = vmatprep.subr.bf16.mxu0 0
    %121 = vmatpush1.bf16.msra.mxu0 0
    %122 = vmatprep.subr.bf16.mxu0 0
    %123 = vmatpush1.bf16.msra.mxu0 0
    %124 = vmatprep.subr.bf16.mxu0 0
    %125 = vmatpush1.bf16.msra.mxu0 0
    %126 = vmatprep.subr.bf16.mxu0 0
    %127 = vmatpush1.bf16.msra.mxu0 0
    %128 = vmatprep.subr.bf16.mxu0 0
    %129 = vmatpush1.bf16.msra.mxu0 0
    %130 = vmatprep.subr.bf16.mxu0 0
    %131 = vmatpush1.bf16.msra.mxu0 0
    %132 = vmatprep.subr.bf16.mxu0 0
    %133 = vmatpush1.bf16.msra.mxu0 0
    %134 = vmatprep.subr.bf16.mxu0 0
    %135 = vmatpush1.bf16.msra.mxu0 0
    %136 = vmatprep.subr.bf16.mxu0 0
    %137 = vmatpush1.bf16.msra.mxu0 0
    %138 = vmatprep.subr.bf16.mxu0 0
    %139 = vmatpush1.bf16.msra.mxu0 0
    %140 = vmatprep.subr.bf16.mxu0 0
    %141 = vmatpush1.bf16.msra.mxu0 0
    %142 = vmatprep.subr.bf16.mxu0 0
    %143 = vmatpush1.bf16.msra.mxu0 0
    %144 = vmatprep.subr.bf16.mxu0 0
    %145 = vmatpush1.bf16.msra.mxu0 0
    %146 = vmatprep.subr.bf16.mxu0 0
    %147 = vmatpush1.bf16.msra.mxu0 0
    %148 = vmatprep.mubr.bf16.mxu0 0
    %149 = vmatmul.mubr.bf16.gmra.mrb[0].mxu0 %v114
    %v150 = vpop.f32.mrb[0].mxu0
    %v151 = vadd.f32 %v100, %v150
    %v152 = vpop.f32.mrb[0].mxu0
    %v153 = vpop.f32.mrb[0].mxu0
    %v154 = vadd.f32 %v100, %v153
    %v155 = vpop.f32.mrb[0].mxu0
    %156 = vdwg.mxu0
    %157 = vst.msk [vmem:[#allocation2] sm:$0xff] %vm50, %v151
    %158 = vst.msk [vmem:[#allocation2 + $0x8] sm:$0xff] %vm50, %v154
    // Predicated region
    $region18: #{tpu_custom_call.1} parent=1 // pred_check
      _
    $region19: #{tpu_custom_call.1} parent=1 // pred_check_branch
      %160 = sbr.rel (0) target = $region21
    $region20: #{tpu_custom_call.1} parent=1 // pred_region
      %s162 = ssub.s32 256, 256
      %163 = vsyncadd [#allocation3], %s162
      %s164 = sshll.u32 [#allocation2], 4
      %s165 = int_to_ptr.vmem [resolvable:$true] %s164
      %170 = dma.vmem_to_hbm [thread:$0]  %s165, 256, %s4, [#allocation3], 128, 128, 8
    $region21: #{tpu_custom_call.1} parent=1 // pred_fallthru
      _
    // Predicated region
    $region22: #{tpu_custom_call.1} parent=1 // pred_check
      _
    $region23: #{tpu_custom_call.1} parent=1 // pred_check_branch
      %172 = sbr.rel (0) target = $region25
    $region24: #{tpu_custom_call.1} parent=1 // pred_region
      %173 = dma.done [#allocation3], 256
    $region25: #{tpu_custom_call.1} parent=1 // pred_fallthru
      _
    %174 = vsyncpa [#allocation3], 1

</llo_original>
